<compile_context>
chip_gen: v7x
topology: tpu7x:2x2x1
jax: 0.10.0
libtpu: 0.0.40
codegen_flags: <defaults>
</compile_context>

<pallas_src>
import functools

import jax
import jax.numpy as jnp
from jax.experimental import pallas as pl
from jax.experimental.pallas import tpu as pltpu


def _imrot_loss_kernel(total_b, tile_rows, x_ref, w_ref, lbl_ref, out_ref):
    # x_ref:   (TB, D)   features (native dtype, f32 or bf16)
    # w_ref:   (C, D)    classifier weight, nn.Linear layout (no bias)
    # lbl_ref: (1, TB)   int32 labels in [0, C), lane-dense
    # out_ref: (1, 1, 1) f32 partial sum of per-example CE loss for this tile
    i = pl.program_id(0)

    x = x_ref[...]
    w = w_ref[...]
    lbl = lbl_ref[...]                                        # (1, TB)

    # logits^T = w @ x^T, expressed as a contraction over D (no materialized
    # transpose).  Output is lane-dense (C, TB) with f32 MXU accumulation.
    logits = jax.lax.dot_general(
        w, x,
        dimension_numbers=(((1,), (1,)), ((), ())),
        preferred_element_type=jnp.float32)                   # (C, TB) f32

    c = logits.shape[0]
    rows = [logits[k:k + 1, :] for k in range(c)]             # C x (1, TB)

    # Numerically stable log-softmax cross-entropy, class axis unrolled
    # (pure VPU/EUP lane-parallel work, no cross-lane reductions).
    m = rows[0]
    for r in rows[1:]:
        m = jnp.maximum(m, r)                                 # (1, TB)
    denom = jnp.exp(rows[0] - m)
    for r in rows[1:]:
        denom = denom + jnp.exp(r - m)
    lse = m + jnp.log(denom)                                  # (1, TB)

    # NOTE: out-of-range labels (<0 or >=C) silently give label_logit = 0
    # instead of raising like torch.nn.CrossEntropyLoss; inputs assumed valid.
    label_logit = jnp.zeros_like(lse)
    for k in range(c):
        label_logit = jnp.where(lbl == k, rows[k], label_logit)

    per_example = lse - label_logit                           # (1, TB)

    # Mask lanes belonging to the ragged final block (no wrapper padding).
    # Use a select so garbage (possible inf/NaN) in unowned lanes cannot leak.
    col = i * tile_rows + jax.lax.broadcasted_iota(
        jnp.int32, per_example.shape, 1)
    masked = jnp.where(col < total_b, per_example,
                       jnp.zeros_like(per_example))
    out_ref[...] = jnp.sum(masked, keepdims=True).reshape(1, 1, 1)


def _round_up(n, m):
    return ((n + m - 1) // m) * m


def _pick_tile_rows(B, D, itemsize, requested=None):
    """Rows of X per grid step.

    Single tile (== B, block equals full array dims) when the whole batch fits
    the per-buffer byte budget; otherwise a multiple of 128 so the lane-dense
    (1, tb) label block and the (tb, D) feature block stay (8, 128)-legal even
    with a ragged final block.
    """
    lane_d = max(D, 128)                 # D < 128 is lane-padded to 128 in VMEM
    if requested is None:
        target_bytes = 8 << 20           # ~8 MiB / X buffer, ~16 MiB double-buffered
        rows = max(128, (target_bytes // (lane_d * itemsize)) // 128 * 128)
    else:
        rows = max(128, _round_up(int(requested), 128))
    if rows >= B:
        return B
    if requested is None:
        # Best effort: even grid size so v7x's two TensorCores split the batch.
        nb = -(-B // rows)
        if nb % 2 == 1:
            alt = max(128, _round_up(-(-B // (nb + 1)), 128))
            if alt < B and (-(-B // alt)) % 2 == 0:
                rows = alt
    return rows


def imrot_criterion(feature_batch, weight, imrot_labels, *, tile_rows=None):
    """Pallas equivalent of Criterion.forward.

    feature_batch: (B, D) float32 or bfloat16
    weight:        (4, D) classifier weight (nn.Linear(D, 4, bias=False).weight)
    imrot_labels:  (B,)   integer class labels in [0, 4)
    Returns scalar mean cross-entropy loss (float32).
    """
    B, D = feature_batch.shape
    C = weight.shape[0]
    itemsize = jnp.dtype(feature_batch.dtype).itemsize

    tb = _pick_tile_rows(B, D, itemsize, tile_rows)
    nb = pl.cdiv(B, tb)

    # Keep dtypes consistent for the MXU (weight is tiny: C x D).
    w = weight.astype(feature_batch.dtype)
    labels_lane = imrot_labels.astype(jnp.int32).reshape(1, B)

    # Scoped-VMEM limit: cover the double-buffered X tiles plus headroom, but
    # never above v7x's 64 MiB physical VMEM (v5e default scoped is only 16 MiB).
    x_buf_bytes = tb * max(D, 128) * itemsize
    vmem_limit = int(min(64 << 20, max(32 << 20, 2 * x_buf_bytes + (8 << 20))))

    kernel = functools.partial(_imrot_loss_kernel, B, tb)

    partials = pl.pallas_call(
        kernel,
        out_shape=jax.ShapeDtypeStruct((nb, 1, 1), jnp.float32),
        grid=(nb,),
        in_specs=[
            pl.BlockSpec((tb, D), lambda i: (i, 0)),   # features: streamed tiles
            pl.BlockSpec((C, D), lambda i: (0, 0)),    # weight: resident
            pl.BlockSpec((1, tb), lambda i: (0, i)),   # labels: lane-dense, tiny
        ],
        out_specs=pl.BlockSpec((1, 1, 1), lambda i: (i, 0, 0)),
        compiler_params=pltpu.CompilerParams(
            dimension_semantics=("parallel",),
            vmem_limit_bytes=vmem_limit),
    )(feature_batch, w, labels_lane)

    # Mean over the *true* batch size, done outside the kernel.
    return jnp.sum(partials) * (1.0 / B)


def _reference_loss(feature_batch, weight, imrot_labels):
    logits = feature_batch.astype(jnp.float32) @ weight.astype(jnp.float32).T
    picked = jnp.take_along_axis(logits, imrot_labels[:, None].astype(jnp.int32),
                                 axis=-1)[:, 0]
    return jnp.mean(jax.nn.logsumexp(logits, axis=-1) - picked)


if __name__ == "__main__":
    key = jax.random.PRNGKey(0)
    k_x, k_w, k_l, k_x2, k_l2 = jax.random.split(key, 5)

    D = 32     # opt.network_feature_dim
    C = 4      # imrot has 4 rotation classes

    bound = 1.0 / (D ** 0.5)
    weight = jax.random.uniform(k_w, (C, D), minval=-bound, maxval=bound,
                                dtype=jnp.float32)

    # Single-tile path (block == full array dims).
    B = 8
    feature_batch = jax.random.normal(k_x, (B, D), dtype=jnp.float32)
    imrot_labels = jax.random.randint(k_l, (B,), 0, C, dtype=jnp.int32)
    loss = imrot_criterion(feature_batch, weight, imrot_labels)
    jax.block_until_ready(loss)
    ref = _reference_loss(feature_batch, weight, imrot_labels)
    assert jnp.allclose(loss, ref, atol=1e-5, rtol=1e-5), (loss, ref)

    # Multi-tile path with a ragged (unpadded) final block:
    # B=260, tile_rows=128 -> grid of 3, final block has 4 valid rows and
    # 124 masked lanes.  Exercises the grid, parallel semantics and masking.
    B2 = 260
    feature_batch2 = jax.random.normal(k_x2, (B2, D), dtype=jnp.float32)
    imrot_labels2 = jax.random.randint(k_l2, (B2,), 0, C, dtype=jnp.int32)
    loss2 = imrot_criterion(feature_batch2, weight, imrot_labels2, tile_rows=128)
    jax.block_until_ready(loss2)
    ref2 = _reference_loss(feature_batch2, weight, imrot_labels2)
    assert jnp.allclose(loss2, ref2, atol=1e-5, rtol=1e-5), (loss2, ref2)

    print("KERNEL_OK")
</pallas_src>

<mosaic_0001>
module attributes {stable_mosaic.version = 11 : i64} {
  func.func @_imrot_loss_kernel(%arg0: i32, %arg1: memref<8x32xf32, #tpu.memory_space<vmem>>, %arg2: memref<4x32xf32, #tpu.memory_space<vmem>>, %arg3: memref<1x8xi32, #tpu.memory_space<vmem>>, %arg4: memref<1x1x1xf32, #tpu.memory_space<vmem>>) attributes {dimension_semantics = [#tpu.dimension_semantics<parallel>], iteration_bounds = array<i64: 1>, scalar_prefetch = 0 : i64, scratch_operands = 0 : i64, tpu.core_type = #tpu.core_type<tc>, window_params = [{transform_indices = @transform_0, window_bounds = array<i64: 8, 32>}, {pipeline_mode = #tpu.pipeline_mode<synchronous>, transform_indices = @transform_1, window_bounds = array<i64: 4, 32>}, {transform_indices = @transform_2, window_bounds = array<i64: 1, 8>}, {transform_indices = @transform_3, window_bounds = array<i64: 1, 1, 1>}]} {
    %c0 = arith.constant 0 : index
    %c0_0 = arith.constant 0 : index
    %0 = vector.load %arg1[%c0, %c0_0] : memref<8x32xf32, #tpu.memory_space<vmem>>, vector<8x32xf32>
    %c0_1 = arith.constant 0 : index
    %c0_2 = arith.constant 0 : index
    %1 = vector.load %arg2[%c0_1, %c0_2] : memref<4x32xf32, #tpu.memory_space<vmem>>, vector<4x32xf32>
    %c0_3 = arith.constant 0 : index
    %c0_4 = arith.constant 0 : index
    %2 = vector.load %arg3[%c0_3, %c0_4] : memref<1x8xi32, #tpu.memory_space<vmem>>, vector<1x8xi32>
    %cst = arith.constant dense<0.000000e+00> : vector<4x8xf32>
    %3 = tpu.matmul %1, %0, %cst {dimension_numbers = #tpu.dot_dimension_numbers<[1], [1], [0], [0], [0, 0, 1, 0], [], []>} : vector<4x32xf32>, vector<8x32xf32>, vector<4x8xf32> -> vector<4x8xf32>
    %4 = vector.extract_strided_slice %3 {offsets = [0, 0], sizes = [1, 8], strides = [1, 1]} : vector<4x8xf32> to vector<1x8xf32>
    %5 = vector.extract_strided_slice %3 {offsets = [1, 0], sizes = [1, 8], strides = [1, 1]} : vector<4x8xf32> to vector<1x8xf32>
    %6 = vector.extract_strided_slice %3 {offsets = [2, 0], sizes = [1, 8], strides = [1, 1]} : vector<4x8xf32> to vector<1x8xf32>
    %7 = vector.extract_strided_slice %3 {offsets = [3, 0], sizes = [1, 8], strides = [1, 1]} : vector<4x8xf32> to vector<1x8xf32>
    %8 = arith.maximumf %4, %5 : vector<1x8xf32>
    %9 = arith.maximumf %8, %6 : vector<1x8xf32>
    %10 = arith.maximumf %9, %7 : vector<1x8xf32>
    %11 = arith.subf %4, %10 : vector<1x8xf32>
    %12 = math.exp %11 : vector<1x8xf32>
    %13 = arith.subf %5, %10 : vector<1x8xf32>
    %14 = math.exp %13 : vector<1x8xf32>
    %15 = arith.addf %12, %14 : vector<1x8xf32>
    %16 = arith.subf %6, %10 : vector<1x8xf32>
    %17 = math.exp %16 : vector<1x8xf32>
    %18 = arith.addf %15, %17 : vector<1x8xf32>
    %19 = arith.subf %7, %10 : vector<1x8xf32>
    %20 = math.exp %19 : vector<1x8xf32>
    %21 = arith.addf %18, %20 : vector<1x8xf32>
    %22 = math.log %21 : vector<1x8xf32>
    %23 = arith.addf %10, %22 : vector<1x8xf32>
    %cst_5 = arith.constant 0.000000e+00 : f32
    %24 = vector.broadcast %cst_5 : f32 to vector<1x8xf32>
    %c0_i32 = arith.constant 0 : i32
    %25 = vector.broadcast %c0_i32 : i32 to vector<1x8xi32>
    %26 = arith.cmpi eq, %2, %25 : vector<1x8xi32>
    %27 = arith.select %26, %4, %24 : vector<1x8xi1>, vector<1x8xf32>
    %c1_i32 = arith.constant 1 : i32
    %28 = vector.broadcast %c1_i32 : i32 to vector<1x8xi32>
    %29 = arith.cmpi eq, %2, %28 : vector<1x8xi32>
    %30 = arith.select %29, %5, %27 : vector<1x8xi1>, vector<1x8xf32>
    %c2_i32 = arith.constant 2 : i32
    %31 = vector.broadcast %c2_i32 : i32 to vector<1x8xi32>
    %32 = arith.cmpi eq, %2, %31 : vector<1x8xi32>
    %33 = arith.select %32, %6, %30 : vector<1x8xi1>, vector<1x8xf32>
    %c3_i32 = arith.constant 3 : i32
    %34 = vector.broadcast %c3_i32 : i32 to vector<1x8xi32>
    %35 = arith.cmpi eq, %2, %34 : vector<1x8xi32>
    %36 = arith.select %35, %7, %33 : vector<1x8xi1>, vector<1x8xf32>
    %37 = arith.subf %23, %36 : vector<1x8xf32>
    %c8_i32 = arith.constant 8 : i32
    %38 = arith.muli %arg0, %c8_i32 : i32
    %39 = tpu.iota {dimensions = array<i32: 1>} : vector<1x8xi32>
    %40 = vector.broadcast %38 : i32 to vector<1x8xi32>
    %41 = arith.addi %40, %39 : vector<1x8xi32>
    %c8_i32_6 = arith.constant 8 : i32
    %42 = vector.broadcast %c8_i32_6 : i32 to vector<1x8xi32>
    %43 = arith.cmpi slt, %41, %42 : vector<1x8xi32>
    %cst_7 = arith.constant 0.000000e+00 : f32
    %44 = vector.broadcast %cst_7 : f32 to vector<1x8xf32>
    %45 = arith.select %43, %37, %44 : vector<1x8xi1>, vector<1x8xf32>
    %46 = vector.shape_cast %45 : vector<1x8xf32> to vector<1x1x8xf32>
    %cst_8 = arith.constant dense<0.000000e+00> : vector<1xf32>
    %47 = vector.multi_reduction <add>, %46, %cst_8 [1, 2] : vector<1x1x8xf32> to vector<1xf32>
    %48 = vector.shape_cast %47 : vector<1xf32> to vector<1x1x1xf32>
    %49 = vector.extract %48[0, 0, 0] : f32 from vector<1x1x1xf32>
    %50 = vector.broadcast %49 : f32 to vector<1x1xf32>
    %51 = vector.shape_cast %50 : vector<1x1xf32> to vector<1x1x1xf32>
    %c0_9 = arith.constant 0 : index
    %c0_10 = arith.constant 0 : index
    %c0_11 = arith.constant 0 : index
    %52 = vector.load %arg4[%c0_9, %c0_10, %c0_11] : memref<1x1x1xf32, #tpu.memory_space<vmem>>, vector<1x1x1xf32>
    tpu.vector_store %arg4[%c0_9, %c0_10, %c0_11], %51 {strides = array<i32>} : memref<1x1x1xf32, #tpu.memory_space<vmem>>, vector<1x1x1xf32>,
    return
  }
  func.func @transform_0(%arg0: i32) -> (i32, i32) {
    %c0_i32 = arith.constant 0 : i32
    %c0_i32_0 = arith.constant 0 : i32
    return %arg0, %c0_i32 : i32, i32
  }
  func.func @transform_1(%arg0: i32) -> (i32, i32) {
    %c0_i32 = arith.constant 0 : i32
    %c0_i32_0 = arith.constant 0 : i32
    %c0_i32_1 = arith.constant 0 : i32
    return %c0_i32, %c0_i32_0 : i32, i32
  }
  func.func @transform_2(%arg0: i32) -> (i32, i32) {
    %c0_i32 = arith.constant 0 : i32
    %c0_i32_0 = arith.constant 0 : i32
    return %c0_i32, %arg0 : i32, i32
  }
  func.func @transform_3(%arg0: i32) -> (i32, i32, i32) {
    %c0_i32 = arith.constant 0 : i32
    %c0_i32_0 = arith.constant 0 : i32
    %c0_i32_1 = arith.constant 0 : i32
    return %arg0, %c0_i32, %c0_i32_0 : i32, i32, i32
  }
}

</mosaic_0001>

<llo_original>
// kernel: tpu_custom_call.1
$region0: #{tpu_custom_call.1}
  #allocation0 [shape = 'u32[]', space=smem, size = 0x4, offset = 0x4, fixed_abs, tag = 'smem constant byte address 0x4 - core index']
  #allocation1 [shape = 'u32[144,128]{1,0:T(1,128)}', space=vmem, size = 0x12000, scoped, tag = 'internal scratch']
  %s0 = inlined_call_operand.hbm [shape: f32[8,32], index: 0, kind: input, shape index: {}]
  %s1 = inlined_call_operand.hbm [shape: f32[4,32], index: 1, kind: input, shape index: {}]
  %s2 = inlined_call_operand.vmem [shape: s32[1,8], index: 2, kind: input, shape index: {}]
  %s3 = inlined_call_operand.hbm [shape: f32[1,1,1], index: 3, kind: output, shape index: {}]
  %s4 = sld [smem:[#allocation0]]
  $region30: #{tpu_custom_call.1} parent=0
    _
  %s6 = ssub.s32 1, %s4
  %s7 = scalar_select 0, %s6, %s4
  $region1: #{tpu_custom_call.1} parent=0
    #allocation2 [shape = 'u8[4096]{0}', space=vmem, size = 0x1000, scoped, tag = 'input window, operand 0, single buffered']
    #allocation3 [shape = 's32[1]{0}', space=sflag, size = 0x4, scoped, tag = 'scoped memory for tpu_custom_call.1']
    #allocation4 [shape = 's32[1]{0}', space=sflag, size = 0x4, scoped, tag = 'scoped memory for tpu_custom_call.1']
    #allocation5 [shape = 'u8[2048]{0}', space=vmem, size = 0x800, scoped, tag = 'input window, operand 1, single buffered']
    #allocation6 [shape = 's32[1]{0}', space=sflag, size = 0x4, scoped, tag = 'scoped memory for tpu_custom_call.1']
    #allocation7 [shape = 'u8[512]{0}', space=vmem, size = 0x400, scoped, tag = 'output window, operand 0, single buffered']
    %8 = vsyncpa [#allocation3], 0
    %9 = vsyncpa [#allocation6], 0
    %10 = vsyncpa [#allocation4], 0
    // Predicated region
    $region2: #{tpu_custom_call.1} parent=1 // pred_check
      _
    $region3: #{tpu_custom_call.1} parent=1 // pred_check_branch
      %12 = sbr.rel (0) target = $region5
    $region4: #{tpu_custom_call.1} parent=1 // pred_region
      %s14 = ssub.s32 128, 128
      %15 = vsyncadd [#allocation3], %s14
      %s17 = sshll.u32 [#allocation2], 4
      %s18 = int_to_ptr.vmem [resolvable:$true] %s17
      %20 = dma.hbm_to_vmem [thread:$0]  %s0, 128, %s18, [#allocation3]
    $region5: #{tpu_custom_call.1} parent=1 // pred_fallthru
      _
    // Predicated region
    $region6: #{tpu_custom_call.1} parent=1 // pred_check
      _
    $region7: #{tpu_custom_call.1} parent=1 // pred_check_branch
      %22 = sbr.rel (0) target = $region9
    $region8: #{tpu_custom_call.1} parent=1 // pred_region
      %s24 = ssub.s32 64, 64
      %25 = vsyncadd [#allocation6], %s24
      %s27 = sshll.u32 [#allocation5], 4
      %s28 = int_to_ptr.vmem [resolvable:$true] %s27
      %30 = dma.hbm_to_vmem [thread:$0]  %s1, 64, %s28, [#allocation6]
    $region9: #{tpu_custom_call.1} parent=1 // pred_fallthru
      _
    // Predicated region
    $region10: #{tpu_custom_call.1} parent=1 // pred_check
      _
    $region11: #{tpu_custom_call.1} parent=1 // pred_check_branch
      %32 = sbr.rel (0) target = $region13
    $region12: #{tpu_custom_call.1} parent=1 // pred_region
      _
    $region13: #{tpu_custom_call.1} parent=1 // pred_fallthru
      _
    // Predicated region
    $region14: #{tpu_custom_call.1} parent=1 // pred_check
      _
    $region15: #{tpu_custom_call.1} parent=1 // pred_check_branch
      %34 = sbr.rel (0) target = $region17
    $region16: #{tpu_custom_call.1} parent=1 // pred_region
      %35 = dma.done [#allocation3], 128
    $region17: #{tpu_custom_call.1} parent=1 // pred_fallthru
      _
    // Predicated region
    $region18: #{tpu_custom_call.1} parent=1 // pred_check
      _
    $region19: #{tpu_custom_call.1} parent=1 // pred_check_branch
      %37 = sbr.rel (0) target = $region21
    $region20: #{tpu_custom_call.1} parent=1 // pred_region
      %38 = dma.done [#allocation6], 64
    $region21: #{tpu_custom_call.1} parent=1 // pred_fallthru
      _
    %v39 = vld [vmem:[#allocation2] sm:$0xff]
    %v40 = vld [vmem:[#allocation5] sm:$0xf]
    %v41 = vld [vmem:[%s2] sm:$0x1]
    %vm42 = vcmask 261120
    %v44 = vsel %vm42, %v40, 0
    %v47 = vsel %vm42, %v39, 0
    %49 = vmatprep.subr.mxu0 0.0
    %50 = vmatpush1.xpose.msra.mxu0 %v47
    %51 = vmatprep.subr.mxu0 0.0
    %52 = vmatpush1.xpose.msra.mxu0 0.0
    %53 = vmatprep.subr.mxu0 0.0
    %54 = vmatpush1.xpose.msra.mxu0 0.0
    %55 = vmatprep.subr.mxu0 0.0
    %56 = vmatpush1.xpose.msra.mxu0 0.0
    %57 = vmatprep.subr.mxu0 0.0
    %58 = vmatpush1.xpose.msra.mxu0 0.0
    %59 = vmatprep.subr.mxu0 0.0
    %60 = vmatpush1.xpose.msra.mxu0 0.0
    %61 = vmatprep.subr.mxu0 0.0
    %62 = vmatpush1.xpose.msra.mxu0 0.0
    %63 = vmatprep.subr.mxu0 0.0
    %64 = vmatpush1.xpose.msra.mxu0 0.0
    %65 = vmatprep.subr.mxu0 0.0
    %66 = vmatpush1.xpose.msra.mxu0 0.0
    %67 = vmatprep.subr.mxu0 0.0
    %68 = vmatpush1.xpose.msra.mxu0 0.0
    %69 = vmatprep.subr.mxu0 0.0
    %70 = vmatpush1.xpose.msra.mxu0 0.0
    %71 = vmatprep.subr.mxu0 0.0
    %72 = vmatpush1.xpose.msra.mxu0 0.0
    %73 = vmatprep.subr.mxu0 0.0
    %74 = vmatpush1.xpose.msra.mxu0 0.0
    %75 = vmatprep.subr.mxu0 0.0
    %76 = vmatpush1.xpose.msra.mxu0 0.0
    %77 = vmatprep.subr.mxu0 0.0
    %78 = vmatpush1.xpose.msra.mxu0 0.0
    %79 = vmatprep.subr.mxu0 0.0
    %80 = vmatpush1.xpose.msra.mxu0 0.0
    %81 = vmatprep.subr.mxu0 0.0
    %82 = vmatpush1.xpose.msra.mxu0 0.0
    %83 = vmatprep.subr.mxu0 0.0
    %84 = vmatpush1.xpose.msra.mxu0 0.0
    %85 = vmatprep.subr.mxu0 0.0
    %86 = vmatpush1.xpose.msra.mxu0 0.0
    %87 = vmatprep.subr.mxu0 0.0
    %88 = vmatpush1.xpose.msra.mxu0 0.0
    %89 = vmatprep.subr.mxu0 0.0
    %90 = vmatpush1.xpose.msra.mxu0 0.0
    %91 = vmatprep.subr.mxu0 0.0
    %92 = vmatpush1.xpose.msra.mxu0 0.0
    %93 = vmatprep.subr.mxu0 0.0
    %94 = vmatpush1.xpose.msra.mxu0 0.0
    %95 = vmatprep.subr.mxu0 0.0
    %96 = vmatpush1.xpose.msra.mxu0 0.0
    %97 = vmatprep.subr.mxu0 0.0
    %98 = vmatpush1.xpose.msra.mxu0 0.0
    %99 = vmatprep.subr.mxu0 0.0
    %100 = vmatpush1.xpose.msra.mxu0 0.0
    %101 = vmatprep.subr.mxu0 0.0
    %102 = vmatpush1.xpose.msra.mxu0 0.0
    %103 = vmatprep.subr.mxu0 0.0
    %104 = vmatpush1.xpose.msra.mxu0 0.0
    %105 = vmatprep.subr.mxu0 0.0
    %106 = vmatpush1.xpose.msra.mxu0 0.0
    %107 = vmatprep.subr.mxu0 0.0
    %108 = vmatpush1.xpose.msra.mxu0 0.0
    %109 = vmatprep.subr.mxu0 0.0
    %110 = vmatpush1.xpose.msra.mxu0 0.0
    %111 = vmatprep.subr.mxu0 0.0
    %112 = vmatpush1.xpose.msra.mxu0 0.0
    %113 = vmatprep.mubr.f32.mxu0 0.0
    %114 = vmatmul.mubr.f32.gmra.mrb[0].mxu0 %v44
    %v115 = vpop.f32.mrb[0].mxu0
    %v116 = vadd.f32 0.0, %v115
    %v117 = vpop.f32.mrb[0].mxu0
    %118 = vdwg.mxu0
    %v120 = vrot.slane %v116, 1
    %v122 = vmax.f32 %v116, %v120
    %v123 = vrot.slane %v116, 2
    %v125 = vmax.f32 %v122, %v123
    %v126 = vrot.slane %v116, 3
    %v128 = vmax.f32 %v125, %v126
    %v129 = vsub.f32 %v116, %v128
    %v130 = vmul.f32 %v129, 1.442695
    %v131 = vpow.pop %v130
    %v133 = vrot.slane %v128, 7
    %v135 = vsub.f32 %v116, %v133
    %v136 = vmul.f32 %v135, 1.442695
    %v137 = vpow.pop %v136
    %v139 = vrot.slane %v137, 1
    %v141 = vadd.f32 %v131, %v139
    %v142 = vrot.slane %v128, 6
    %v144 = vsub.f32 %v116, %v142
    %v145 = vmul.f32 %v144, 1.442695
    %v146 = vpow.pop %v145
    %v148 = vrot.slane %v146, 2
    %v150 = vadd.f32 %v141, %v148
    %v151 = vrot.slane %v128, 5
    %v153 = vsub.f32 %v116, %v151
    %v154 = vmul.f32 %v153, 1.442695
    %v155 = vpow.pop %v154
    %v157 = vrot.slane %v155, 3
    %v159 = vadd.f32 %v150, %v157
    %v160 = vlog2.pop %v159
    %v161 = vmul.f32 %v160, 0.6931472
    %v162 = vadd.f32 %v128, %v161
    %vm163 = vcmp.eq.s32.totalorder %v41, 0
    %v164 = vsel %vm163, %v116, 0.0
    %vm165 = vcmp.eq.s32.totalorder %v41, 1
    %v167 = vunpack.c.l.s4 1966171168
    %v168 = vunpack.c.0.s8 %v167
    %v169 = vlaneseq
    %v170 = vshrl.u32 %v169, 7
    %v171 = vsub.s32 %v168, %v170
    %v172 = vrot.slane %v116, %v171
    %v173 = vcombine.high %v172, %v172
    %v175 = vunpack.c.l.s4 1966171168
    %v176 = vunpack.c.0.s8 %v175
    %v177 = vlaneseq
    %v178 = vshrl.u32 %v177, 7
    %v179 = vsub.s32 %v176, %v178
    %v180 = vrot.slane %v172, %v179
    %v182 = vunpack.c.l.s4 1966171168
    %v183 = vunpack.c.0.s8 %v182
    %v184 = vlaneseq
    %v185 = vshrl.u32 %v184, 7
    %v186 = vsub.s32 %v183, %v185
    %v187 = vrot.slane %v173, %v186
    %v189 = vsel %vm165, %v187, %v164
    %vm190 = vcmp.eq.s32.totalorder %v41, 2
    %v191 = vcombine.high %v180, %v180
    %v193 = vsel %vm190, %v191, %v189
    %vm194 = vcmp.eq.s32.totalorder %v41, 3
    %v195 = vcombine.high %v187, %v187
    %v197 = vsel %vm194, %v195, %v193
    %v198 = vsub.f32 %v162, %v197
    %s199 = smul.u32 0, 8
    %v200 = vlaneseq
    %v201 = vand.u32 %v200, 127
    %v202 = vstv %s199
    %v203 = vadd.s32 %v202, %v201
    %vm204 = vcmp.lt.s32.totalorder %v203, 8
    %v205 = vsel %vm204, %v198, 0.0
    %vm206 = vcmask 57344
    %v207 = vsel %vm206, %v205, 0.0
    %208 = vadd.xlane.f32.xlu0 %v207
    %v209 = vpop.xlane.xlu0 %208
    %v210 = vrot.slane %v209, 4
    %v211 = vadd.f32 %v209, %v210
    %v212 = vrot.slane %v211, 2
    %v213 = vadd.f32 %v211, %v212
    %v214 = vrot.slane %v213, 1
    %v215 = vadd.f32 %v213, %v214
    %s216 = vtos %v215
    %v217 = vstv %s216
    %vm218 = vcmask 0
    %219 = vst.msk [vmem:[#allocation7] sm:$0x1] %vm218, %v217
    // Predicated region
    $region22: #{tpu_custom_call.1} parent=1 // pred_check
      _
    $region23: #{tpu_custom_call.1} parent=1 // pred_check_branch
      %221 = sbr.rel (0) target = $region25
    $region24: #{tpu_custom_call.1} parent=1 // pred_region
      %s223 = ssub.s32 16, 16
      %224 = vsyncadd [#allocation4], %s223
      %s226 = sshll.u32 [#allocation7], 4
      %s227 = int_to_ptr.vmem [resolvable:$true] %s226
      %229 = dma.vmem_to_hbm [thread:$0]  %s227, 16, %s3, [#allocation4]
    $region25: #{tpu_custom_call.1} parent=1 // pred_fallthru
      _
    // Predicated region
    $region26: #{tpu_custom_call.1} parent=1 // pred_check
      _
    $region27: #{tpu_custom_call.1} parent=1 // pred_check_branch
      %231 = sbr.rel (0) target = $region29
    $region28: #{tpu_custom_call.1} parent=1 // pred_region
      %232 = dma.done [#allocation4], 16
    $region29: #{tpu_custom_call.1} parent=1 // pred_fallthru
      _
    %233 = vsyncpa [#allocation3], 1
    %234 = vsyncpa [#allocation6], 1
    %235 = vsyncpa [#allocation4], 1

</llo_original>
